<compile_context>
chip_gen: v6e
topology: v6e:2x2x1
jax: 0.10.0
libtpu: 0.0.40
codegen_flags: <defaults>
</compile_context>

<pallas_src>
import jax
import jax.numpy as jnp
from jax.experimental import pallas as pl
from jax.experimental.pallas import tpu as pltpu


def _task_weighter_kernel(loss_ref, w_ref, out_ref):
    # loss_ref: (1, task_num) f32 VMEM  -> [main, aux_1 .. aux_n]
    # w_ref:    (1, task_num) f32 VMEM  -> [1.0,  alpha_1 .. alpha_n]
    # out_ref:  (1, 1)        f32 SMEM scalar result.
    # VPU elementwise multiply + XLU cross-lane reduce; lane 0 weight of 1.0
    # folds the main-loss add into the same multiply+reduce.
    out_ref[0, 0] = jnp.sum(loss_ref[...] * w_ref[...])


def make_weight_row(alpha):
    """Build (once, at parameter-init time) the (1, task_num) weight row.

    Lane 0 is fixed to 1.0 so that main_loss * 1.0 folds the scalar add into
    the same multiply+reduce as the aux terms.  No lane padding: the kernel
    uses the full (1, task_num) array as its block.
    """
    alpha = jnp.asarray(alpha, jnp.float32).reshape(-1)
    row = jnp.concatenate([jnp.ones((1,), jnp.float32), alpha])
    return row.reshape(1, row.shape[0])


def task_weighter_forward(losses, weight_row):
    """losses: list/tuple of task_num scalar losses.
    weight_row: (1, task_num) f32 from make_weight_row(alpha).

    Returns a (1, 1) f32 array (caller may squeeze inside its own jit).
    """
    task_num = len(losses)
    assert weight_row.shape == (1, task_num)

    # Per-call loss row: [main, aux_1..aux_n], no padding / packing.
    loss_row = jnp.stack(
        [jnp.asarray(l, jnp.float32) for l in losses], axis=0
    ).reshape(1, task_num)

    cost = pl.CostEstimate(
        flops=2 * task_num,
        transcendentals=0,
        bytes_accessed=4 * (2 * task_num + 1),
    )

    out = pl.pallas_call(
        _task_weighter_kernel,
        out_shape=jax.ShapeDtypeStruct((1, 1), jnp.float32),
        in_specs=[
            pl.BlockSpec(memory_space=pltpu.VMEM),  # loss row (full array)
            pl.BlockSpec(memory_space=pltpu.VMEM),  # weight row (full array)
        ],
        out_specs=pl.BlockSpec(memory_space=pltpu.SMEM),  # scalar result
        cost_estimate=cost,
    )(loss_row, weight_row)
    return out  # (1, 1)


if __name__ == "__main__":
    task_num = 5  # Task_Weighter(task_num=5) -> alpha has shape (4,)

    key = jax.random.PRNGKey(0)
    # Deterministic synthetic scalar losses (what the forward consumes).
    losses_arr = jax.random.uniform(
        key, (task_num,), jnp.float32, minval=0.1, maxval=2.0
    )
    losses = [losses_arr[i] for i in range(task_num)]

    # Parameter init matches nn.Parameter(torch.ones(task_num - 1)); the
    # weight row (lane 0 = 1.0) is built once here, outside the per-call path.
    alpha = jnp.ones((task_num - 1,), jnp.float32)
    weight_row = make_weight_row(alpha)

    fwd = jax.jit(task_weighter_forward)
    out = fwd(losses, weight_row)
    out = jax.block_until_ready(out)

    # Reference check in plain JAX.
    ref = losses_arr[0] + jnp.sum(losses_arr[1:] * alpha)
    assert jnp.allclose(out[0, 0], ref, rtol=1e-6, atol=1e-6), (out, ref)

    print("KERNEL_OK")
</pallas_src>

<mosaic_0001>
module attributes {stable_mosaic.version = 11 : i64} {
  func.func @_task_weighter_kernel(%arg0: memref<1x5xf32, #tpu.memory_space<vmem>>, %arg1: memref<1x5xf32, #tpu.memory_space<vmem>>, %arg2: memref<1x1xf32, #tpu.memory_space<smem>>) attributes {dimension_semantics = [], scalar_prefetch = 0 : i64, scratch_operands = 0 : i64, tpu.core_type = #tpu.core_type<tc>} {
    %c0 = arith.constant 0 : index
    %c0_0 = arith.constant 0 : index
    %0 = vector.load %arg0[%c0, %c0_0] : memref<1x5xf32, #tpu.memory_space<vmem>>, vector<1x5xf32>
    %c0_1 = arith.constant 0 : index
    %c0_2 = arith.constant 0 : index
    %1 = vector.load %arg1[%c0_1, %c0_2] : memref<1x5xf32, #tpu.memory_space<vmem>>, vector<1x5xf32>
    %2 = arith.mulf %0, %1 : vector<1x5xf32>
    %3 = vector.shape_cast %2 : vector<1x5xf32> to vector<1x1x5xf32>
    %cst = arith.constant dense<0.000000e+00> : vector<1xf32>
    %4 = vector.multi_reduction <add>, %3, %cst [1, 2] : vector<1x1x5xf32> to vector<1xf32>
    %5 = vector.shape_cast %4 : vector<1xf32> to vector<1x1x1xf32>
    %6 = vector.extract %5[0, 0, 0] : f32 from vector<1x1x1xf32>
    %c0_3 = arith.constant 0 : index
    %c0_4 = arith.constant 0 : index
    %7 = memref.load %arg2[%c0_3, %c0_4] : memref<1x1xf32, #tpu.memory_space<smem>>
    memref.store %6, %arg2[%c0_3, %c0_4] : memref<1x1xf32, #tpu.memory_space<smem>>
    return
  }
}

</mosaic_0001>

<llo_original>
// kernel: task_weighter_forward.1
$region0: #{task_weighter_forward.1}
  #allocation0 [shape = 'u32[]', space=smem, size = 0x4, offset = 0x4, fixed_abs, tag = 'smem constant byte address 0x4 - core index']
  #allocation1 [shape = 'u32[144,128]{1,0:T(1,128)}', space=vmem, size = 0x12000, scoped, tag = 'internal scratch']
  %s0 = inlined_call_operand.vmem [shape: f32[1,5], index: 0, kind: input, shape index: {}]
  %s1 = inlined_call_operand.vmem [shape: f32[1,5], index: 1, kind: input, shape index: {}]
  %s2 = inlined_call_operand.hbm [shape: f32[1,1], index: 2, kind: output, shape index: {}]
  %s3 = sld [smem:[#allocation0]]
  $region18: #{task_weighter_forward.1} parent=0
    _
  %s5 = ssub.s32 1, %s3
  %s6 = scalar_select 0, %s5, %s3
  $region1: #{task_weighter_forward.1} parent=0
    #allocation2 [shape = 'u8[512]{0}', space=smem, size = 0x200, scoped, tag = 'output window, operand 0, single buffered']
    #allocation3 [shape = 's32[1]{0}', space=sflag, size = 0x4, scoped, tag = 'scoped memory for task_weighter_forward.1']
    %7 = vsyncpa [#allocation3], 0
    // Predicated region
    $region2: #{task_weighter_forward.1} parent=1 // pred_check
      _
    $region3: #{task_weighter_forward.1} parent=1 // pred_check_branch
      %9 = sbr.rel (0) target = $region5
    $region4: #{task_weighter_forward.1} parent=1 // pred_region
      _
    $region5: #{task_weighter_forward.1} parent=1 // pred_fallthru
      _
    // Predicated region
    $region6: #{task_weighter_forward.1} parent=1 // pred_check
      _
    $region7: #{task_weighter_forward.1} parent=1 // pred_check_branch
      %11 = sbr.rel (0) target = $region9
    $region8: #{task_weighter_forward.1} parent=1 // pred_region
      _
    $region9: #{task_weighter_forward.1} parent=1 // pred_fallthru
      _
    %v12 = vld [vmem:[%s0] sm:$0x1]
    %v13 = vld [vmem:[%s1] sm:$0x1]
    %v14 = vmul.f32 %v12, %v13
    %vm15 = vcmask 32768
    %v16 = vsel %vm15, %v14, 0.0
    %17 = vadd.xlane.f32.xlu0 %v16
    %v18 = vpop.xlane.xlu0 %17
    %v19 = vrot.slane %v18, 4
    %v20 = vadd.f32 %v18, %v19
    %v21 = vrot.slane %v20, 2
    %v22 = vadd.f32 %v20, %v21
    %v23 = vrot.slane %v22, 1
    %v24 = vadd.f32 %v22, %v23
    %s25 = vtos %v24
    %s26 = scalar_lea.smem [#allocation2], 0
    %27 = sst [smem:[%s26]] %s25
    // Predicated region
    $region10: #{task_weighter_forward.1} parent=1 // pred_check
      _
    $region11: #{task_weighter_forward.1} parent=1 // pred_check_branch
      %29 = sbr.rel (0) target = $region13
    $region12: #{task_weighter_forward.1} parent=1 // pred_region
      %s31 = ssub.s32 16, 16
      %32 = vsyncadd [#allocation3], %s31
      %35 = dma.smem_to_hbm [#allocation2], 16, %s2, [#allocation3]
    $region13: #{task_weighter_forward.1} parent=1 // pred_fallthru
      _
    // Predicated region
    $region14: #{task_weighter_forward.1} parent=1 // pred_check
      _
    $region15: #{task_weighter_forward.1} parent=1 // pred_check_branch
      %37 = sbr.rel (0) target = $region17
    $region16: #{task_weighter_forward.1} parent=1 // pred_region
      %38 = dma.done [#allocation3], 16
    $region17: #{task_weighter_forward.1} parent=1 // pred_fallthru
      _
    %39 = sfence
    %40 = vsyncpa [#allocation3], 1

</llo_original>
